<compile_context>
chip_gen: v5e
topology: v5e:2x2
jax: 0.10.0
libtpu: 0.0.40
codegen_flags: <defaults>
</compile_context>

<pallas_src>
import jax
import jax.numpy as jnp
from jax.experimental import pallas as pl
from jax.experimental.pallas import tpu as pltpu


_VMEM_SOFT_BUDGET = 40 * 1024 * 1024      # keep clear of v7x's 64 MiB physical VMEM
_DEFAULT_SCOPED_VMEM = 16 * 1024 * 1024   # smallest default scoped limit (v5e)


def _round_up(x: int, m: int) -> int:
    return pl.cdiv(x, m) * m


def _similarity_linear2_kernel(s1_ref, s2_ref, wh_ref, bhwo_ref, bo_ref, out_ref):
    # s1_ref, s2_ref : VMEM (Bt, E)      in_dtype -- batch tile of sentence vectors
    # wh_ref         : VMEM (4, E, H)    in_dtype -- W_h split into its 4 E-blocks
    # bhwo_ref       : VMEM (2, H)       f32      -- row 0 = b_h, row 1 = W_o (as a row)
    # bo_ref         : VMEM (1, 1)       f32
    # out_ref        : VMEM (1, Bt)      f32      -- lane-dense output row
    s1 = s1_ref[...]
    s2 = s2_ref[...]
    mult = s1 * s2
    absd = jnp.abs(s1 - s2)

    # cat([s1, s2, mult, absd], -1) @ W_h  ==  sum_k part_k @ W_h_block_k
    # acc += jnp.dot(...) keeps partials accumulating on the MXU result path
    # (MRB in-place accumulation on v7x) instead of extra VPU adds.
    acc = jnp.dot(s1, wh_ref[0], preferred_element_type=jnp.float32)
    acc += jnp.dot(s2, wh_ref[1], preferred_element_type=jnp.float32)
    acc += jnp.dot(mult, wh_ref[2], preferred_element_type=jnp.float32)
    acc += jnp.dot(absd, wh_ref[3], preferred_element_type=jnp.float32)

    h = jnp.tanh(acc + bhwo_ref[0:1, :])                    # (Bt, H), EUP tanh

    # (H -> 1) projection as VPU multiply + lane reduce (avoids an N=1 matmul),
    # then store lane-dense as a (1, Bt) row (XLU relayout, effectively free).
    logits = jnp.sum(h * bhwo_ref[1:2, :], axis=-1)         # (Bt,)
    logits = logits[None, :] + bo_ref[...]                  # (1, Bt)
    out_ref[...] = jax.nn.sigmoid(logits).astype(out_ref.dtype)


def similarity_linear2(sent1vec: jax.Array,
                       sent2vec: jax.Array,
                       wh: jax.Array,   # (4E, H)  so that predictor_h(x) = x @ wh + bh
                       bh: jax.Array,   # (H,)
                       wo: jax.Array,   # (H, 1)   so that predictor_o(h) = h @ wo + bo
                       bo: jax.Array,   # (1,)
                       *,
                       batch_tile: int = 512) -> jax.Array:
    """Pallas equivalent of SimilarityLinear2.forward.

    sent1vec / sent2vec : (embed,) or (batch, embed), f32 or bf16
    returns             : (1,) or (batch, 1) float32
    """
    squeeze_batch = sent1vec.ndim == 1
    if squeeze_batch:
        sent1vec = sent1vec[None, :]
        sent2vec = sent2vec[None, :]

    batch, embed = sent1vec.shape
    four_e, hidden = wh.shape
    assert four_e == 4 * embed and wo.shape == (hidden, 1)
    assert sent1vec.dtype == sent2vec.dtype

    f32 = jnp.float32
    in_dtype = sent1vec.dtype
    itemsize = jnp.dtype(in_dtype).itemsize
    sublane = 8 * (4 // itemsize)          # 8 for f32, 16 for bf16

    # ---- batch tile selection (the single largest lever for real batches) ----
    def vmem_est(bt: int) -> int:
        ins = 2 * 2 * bt * embed * itemsize                       # s1,s2 double-buffered
        wts = 2 * (4 * embed * hidden * itemsize + 2 * hidden * 4 + 4)
        outs = 2 * bt * 4
        return ins + wts + outs

    req = max(int(batch_tile), sublane)
    if batch <= req:
        # Single tile covering the whole (sublane-padded) batch: block == full dims.
        bt = _round_up(batch, sublane)
        b_pad = bt
    else:
        # Multi-tile: keep the tile a multiple of 128 so the (1, bt) output
        # block stays lane-dense/legal, and auto-shrink to respect VMEM.
        bt = max(128, (req // 128) * 128)
        b_pad = _round_up(batch, bt)
        while b_pad // bt > 1 and bt > 128 and vmem_est(bt) > _VMEM_SOFT_BUDGET:
            bt = max(128, ((bt // 2) // 128) * 128)
            b_pad = _round_up(batch, bt)
    assert bt % sublane == 0 and (bt == b_pad or bt % 128 == 0)

    # ---- pad only the batch axis (zero rows are inert and sliced off) ----
    if b_pad != batch:
        pad = ((0, b_pad - batch), (0, 0))
        s1p = jnp.pad(sent1vec, pad)
        s2p = jnp.pad(sent2vec, pad)
    else:
        s1p, s2p = sent1vec, sent2vec

    # ---- cheap parameter prep: reshapes/stacks only, no padded copies ----
    wh4 = wh.astype(in_dtype).reshape(4, embed, hidden)           # (4, E, H)
    bhwo = jnp.stack([jnp.reshape(bh, (-1,)),
                      jnp.reshape(wo, (-1,))]).astype(f32)        # (2, H)
    bo2 = bo.astype(f32).reshape(1, 1)

    grid = (b_pad // bt,)

    est = vmem_est(bt)
    cp_kwargs = dict(dimension_semantics=("parallel",))
    if est > _DEFAULT_SCOPED_VMEM:
        # Only raise the scoped limit when actually needed (large E/H configs).
        cp_kwargs["vmem_limit_bytes"] = int(min(est + (8 << 20), 56 << 20))

    out = pl.pallas_call(
        _similarity_linear2_kernel,
        out_shape=jax.ShapeDtypeStruct((1, b_pad), f32),
        grid_spec=pltpu.PrefetchScalarGridSpec(
            num_scalar_prefetch=0,
            grid=grid,
            in_specs=[
                pl.BlockSpec((bt, embed), lambda i: (i, 0)),
                pl.BlockSpec((bt, embed), lambda i: (i, 0)),
                pl.BlockSpec((4, embed, hidden), lambda i: (0, 0, 0)),
                pl.BlockSpec((2, hidden), lambda i: (0, 0)),
                pl.BlockSpec((1, 1), lambda i: (0, 0)),
            ],
            out_specs=pl.BlockSpec((1, bt), lambda i: (0, i)),
        ),
        compiler_params=pltpu.CompilerParams(**cp_kwargs),
    )(s1p, s2p, wh4, bhwo, bo2)

    out = out[0, :batch][:, None]          # (batch, 1)
    if squeeze_batch:
        out = out[0]                       # (1,), matching the PyTorch 1-D forward
    return out


def similarity_linear2_ref(s1, s2, wh, bh, wo, bo):
    """Pure-JAX reference with the exact PyTorch module semantics."""
    mult = s1 * s2
    absd = jnp.abs(s1 - s2)
    vec = jnp.concatenate([s1, s2, mult, absd], axis=-1)
    h = jnp.tanh(vec @ wh + bh)
    return jax.nn.sigmoid(h @ wo + bo)


if __name__ == "__main__":
    key = jax.random.PRNGKey(0)
    k1, k2, k3, k4, k5, k6, k7, k8 = jax.random.split(key, 8)

    embed_size, hidden_size = 32, 32
    batch = 4

    sent1 = jax.random.normal(k1, (batch, embed_size), dtype=jnp.float32)
    sent2 = jax.random.normal(k2, (batch, embed_size), dtype=jnp.float32)

    # Linear parameters stored so that layer(x) = x @ W + b  (W = torch weight.T).
    wh = 0.1 * jax.random.normal(k3, (4 * embed_size, hidden_size), dtype=jnp.float32)
    bh = 0.1 * jax.random.normal(k4, (hidden_size,), dtype=jnp.float32)
    wo = 0.1 * jax.random.normal(k5, (hidden_size, 1), dtype=jnp.float32)
    bo = 0.1 * jax.random.normal(k6, (1,), dtype=jnp.float32)

    # Batched path (per-row semantics), single-tile regime.
    out = jax.block_until_ready(similarity_linear2(sent1, sent2, wh, bh, wo, bo))
    ref = similarity_linear2_ref(sent1, sent2, wh, bh, wo, bo)

    # 1-D path, exactly as the PyTorch module is used.
    out_1d = jax.block_until_ready(
        similarity_linear2(sent1[0], sent2[0], wh, bh, wo, bo))
    ref_1d = similarity_linear2_ref(sent1[0], sent2[0], wh, bh, wo, bo)

    # Multi-tile regime (exercises the lane-dense grid path + batch padding).
    big_batch = 300
    s1b = jax.random.normal(k7, (big_batch, embed_size), dtype=jnp.float32)
    s2b = jax.random.normal(k8, (big_batch, embed_size), dtype=jnp.float32)
    out_big = jax.block_until_ready(
        similarity_linear2(s1b, s2b, wh, bh, wo, bo, batch_tile=128))
    ref_big = similarity_linear2_ref(s1b, s2b, wh, bh, wo, bo)

    assert out.shape == (batch, 1)
    assert out_1d.shape == (1,)
    assert out_big.shape == (big_batch, 1)
    assert jnp.allclose(out, ref, rtol=1e-5, atol=1e-5)
    assert jnp.allclose(out_1d, ref_1d, rtol=1e-5, atol=1e-5)
    assert jnp.allclose(out_big, ref_big, rtol=1e-5, atol=1e-5)

    print("KERNEL_OK")
</pallas_src>

<mosaic_0001>
module attributes {stable_mosaic.version = 11 : i64} {
  func.func @_similarity_linear2_kernel(%arg0: i32, %arg1: memref<8x32xf32, #tpu.memory_space<vmem>>, %arg2: memref<8x32xf32, #tpu.memory_space<vmem>>, %arg3: memref<4x32x32xf32, #tpu.memory_space<vmem>>, %arg4: memref<2x32xf32, #tpu.memory_space<vmem>>, %arg5: memref<1x1xf32, #tpu.memory_space<vmem>>, %arg6: memref<1x8xf32, #tpu.memory_space<vmem>>) attributes {dimension_semantics = [#tpu.dimension_semantics<parallel>], iteration_bounds = array<i64: 1>, scalar_prefetch = 0 : i64, scratch_operands = 0 : i64, tpu.core_type = #tpu.core_type<tc>, window_params = [{transform_indices = @transform_0, window_bounds = array<i64: 8, 32>}, {transform_indices = @transform_1, window_bounds = array<i64: 8, 32>}, {pipeline_mode = #tpu.pipeline_mode<synchronous>, transform_indices = @transform_2, window_bounds = array<i64: 4, 32, 32>}, {pipeline_mode = #tpu.pipeline_mode<synchronous>, transform_indices = @transform_3, window_bounds = array<i64: 2, 32>}, {pipeline_mode = #tpu.pipeline_mode<synchronous>, transform_indices = @transform_4, window_bounds = array<i64: 1, 1>}, {transform_indices = @transform_5, window_bounds = array<i64: 1, 8>}]} {
    %c0 = arith.constant 0 : index
    %c0_0 = arith.constant 0 : index
    %0 = vector.load %arg1[%c0, %c0_0] : memref<8x32xf32, #tpu.memory_space<vmem>>, vector<8x32xf32>
    %c0_1 = arith.constant 0 : index
    %c0_2 = arith.constant 0 : index
    %1 = vector.load %arg2[%c0_1, %c0_2] : memref<8x32xf32, #tpu.memory_space<vmem>>, vector<8x32xf32>
    %2 = arith.mulf %0, %1 : vector<8x32xf32>
    %3 = arith.subf %0, %1 : vector<8x32xf32>
    %4 = math.absf %3 : vector<8x32xf32>
    %c0_3 = arith.constant 0 : index
    %c0_4 = arith.constant 0 : index
    %c0_5 = arith.constant 0 : index
    %5 = vector.load %arg3[%c0_3, %c0_4, %c0_5] : memref<4x32x32xf32, #tpu.memory_space<vmem>>, vector<1x32x32xf32>
    %6 = vector.shape_cast %5 : vector<1x32x32xf32> to vector<32x32xf32>
    %cst = arith.constant dense<0.000000e+00> : vector<8x32xf32>
    %7 = tpu.matmul %0, %6, %cst {dimension_numbers = #tpu.dot_dimension_numbers<[1], [0], [0], [1], [0, 0, 1, 1], [], []>} : vector<8x32xf32>, vector<32x32xf32>, vector<8x32xf32> -> vector<8x32xf32>
    %c1 = arith.constant 1 : index
    %c0_6 = arith.constant 0 : index
    %c0_7 = arith.constant 0 : index
    %8 = vector.load %arg3[%c1, %c0_6, %c0_7] : memref<4x32x32xf32, #tpu.memory_space<vmem>>, vector<1x32x32xf32>
    %9 = vector.shape_cast %8 : vector<1x32x32xf32> to vector<32x32xf32>
    %cst_8 = arith.constant dense<0.000000e+00> : vector<8x32xf32>
    %10 = tpu.matmul %1, %9, %cst_8 {dimension_numbers = #tpu.dot_dimension_numbers<[1], [0], [0], [1], [0, 0, 1, 1], [], []>} : vector<8x32xf32>, vector<32x32xf32>, vector<8x32xf32> -> vector<8x32xf32>
    %11 = arith.addf %7, %10 : vector<8x32xf32>
    %c2 = arith.constant 2 : index
    %c0_9 = arith.constant 0 : index
    %c0_10 = arith.constant 0 : index
    %12 = vector.load %arg3[%c2, %c0_9, %c0_10] : memref<4x32x32xf32, #tpu.memory_space<vmem>>, vector<1x32x32xf32>
    %13 = vector.shape_cast %12 : vector<1x32x32xf32> to vector<32x32xf32>
    %cst_11 = arith.constant dense<0.000000e+00> : vector<8x32xf32>
    %14 = tpu.matmul %2, %13, %cst_11 {dimension_numbers = #tpu.dot_dimension_numbers<[1], [0], [0], [1], [0, 0, 1, 1], [], []>} : vector<8x32xf32>, vector<32x32xf32>, vector<8x32xf32> -> vector<8x32xf32>
    %15 = arith.addf %11, %14 : vector<8x32xf32>
    %c3 = arith.constant 3 : index
    %c0_12 = arith.constant 0 : index
    %c0_13 = arith.constant 0 : index
    %16 = vector.load %arg3[%c3, %c0_12, %c0_13] : memref<4x32x32xf32, #tpu.memory_space<vmem>>, vector<1x32x32xf32>
    %17 = vector.shape_cast %16 : vector<1x32x32xf32> to vector<32x32xf32>
    %cst_14 = arith.constant dense<0.000000e+00> : vector<8x32xf32>
    %18 = tpu.matmul %4, %17, %cst_14 {dimension_numbers = #tpu.dot_dimension_numbers<[1], [0], [0], [1], [0, 0, 1, 1], [], []>} : vector<8x32xf32>, vector<32x32xf32>, vector<8x32xf32> -> vector<8x32xf32>
    %19 = arith.addf %15, %18 : vector<8x32xf32>
    %c0_15 = arith.constant 0 : index
    %c0_16 = arith.constant 0 : index
    %20 = vector.load %arg4[%c0_15, %c0_16] : memref<2x32xf32, #tpu.memory_space<vmem>>, vector<1x32xf32>
    %21 = vector.broadcast %20 : vector<1x32xf32> to vector<8x32xf32>
    %22 = arith.addf %19, %21 : vector<8x32xf32>
    %23 = math.tanh %22 : vector<8x32xf32>
    %c1_17 = arith.constant 1 : index
    %c0_18 = arith.constant 0 : index
    %24 = vector.load %arg4[%c1_17, %c0_18] : memref<2x32xf32, #tpu.memory_space<vmem>>, vector<1x32xf32>
    %25 = vector.broadcast %24 : vector<1x32xf32> to vector<8x32xf32>
    %26 = arith.mulf %23, %25 : vector<8x32xf32>
    %cst_19 = arith.constant dense<0.000000e+00> : vector<8xf32>
    %27 = vector.multi_reduction <add>, %26, %cst_19 [1] : vector<8x32xf32> to vector<8xf32>
    %28 = vector.shape_cast %27 : vector<8xf32> to vector<1x8xf32>
    %c0_20 = arith.constant 0 : index
    %c0_21 = arith.constant 0 : index
    %29 = vector.load %arg5[%c0_20, %c0_21] : memref<1x1xf32, #tpu.memory_space<vmem>>, vector<1x1xf32>
    %30 = vector.broadcast %29 : vector<1x1xf32> to vector<1x8xf32>
    %31 = arith.addf %28, %30 : vector<1x8xf32>
    %32 = arith.negf %31 : vector<1x8xf32>
    %33 = math.exp %32 : vector<1x8xf32>
    %cst_22 = arith.constant 1.000000e+00 : f32
    %34 = vector.broadcast %cst_22 : f32 to vector<1x8xf32>
    %35 = arith.addf %34, %33 : vector<1x8xf32>
    %36 = arith.divf %34, %35 : vector<1x8xf32>
    %c0_23 = arith.constant 0 : index
    %c0_24 = arith.constant 0 : index
    %37 = vector.load %arg6[%c0_23, %c0_24] : memref<1x8xf32, #tpu.memory_space<vmem>>, vector<1x8xf32>
    tpu.vector_store %arg6[%c0_23, %c0_24], %36 {strides = array<i32>} : memref<1x8xf32, #tpu.memory_space<vmem>>, vector<1x8xf32>,
    return
  }
  func.func @transform_0(%arg0: i32) -> (i32, i32) {
    %c0_i32 = arith.constant 0 : i32
    %c0_i32_0 = arith.constant 0 : i32
    return %arg0, %c0_i32 : i32, i32
  }
  func.func @transform_1(%arg0: i32) -> (i32, i32) {
    %c0_i32 = arith.constant 0 : i32
    %c0_i32_0 = arith.constant 0 : i32
    return %arg0, %c0_i32 : i32, i32
  }
  func.func @transform_2(%arg0: i32) -> (i32, i32, i32) {
    %c0_i32 = arith.constant 0 : i32
    %c0_i32_0 = arith.constant 0 : i32
    %c0_i32_1 = arith.constant 0 : i32
    %c0_i32_2 = arith.constant 0 : i32
    return %c0_i32, %c0_i32_0, %c0_i32_1 : i32, i32, i32
  }
  func.func @transform_3(%arg0: i32) -> (i32, i32) {
    %c0_i32 = arith.constant 0 : i32
    %c0_i32_0 = arith.constant 0 : i32
    %c0_i32_1 = arith.constant 0 : i32
    return %c0_i32, %c0_i32_0 : i32, i32
  }
  func.func @transform_4(%arg0: i32) -> (i32, i32) {
    %c0_i32 = arith.constant 0 : i32
    %c0_i32_0 = arith.constant 0 : i32
    %c0_i32_1 = arith.constant 0 : i32
    return %c0_i32, %c0_i32_0 : i32, i32
  }
  func.func @transform_5(%arg0: i32) -> (i32, i32) {
    %c0_i32 = arith.constant 0 : i32
    %c0_i32_0 = arith.constant 0 : i32
    return %c0_i32, %arg0 : i32, i32
  }
}

</mosaic_0001>

<llo_original>
// kernel: tpu_custom_call.1
$region0: #{tpu_custom_call.1}
  #allocation0 [shape = 'u32[]', space=smem, size = 0x4, offset = 0x4, fixed_abs, tag = 'smem constant byte address 0x4 - core index']
  #allocation1 [shape = 'u32[72,128]{1,0:T(1,128)}', space=vmem, size = 0x9000, scoped, tag = 'internal scratch']
  #allocation2 [shape = 'f32[1,1]{1,0:T(1,128)S(1)}', space=vmem, size = 0x200, scoped, tag = 'scoped memory for tpu_custom_call.1']
  %s0 = inlined_call_operand.hbm [shape: f32[8,32], index: 0, kind: input, shape index: {}]
  %s1 = inlined_call_operand.hbm [shape: f32[8,32], index: 1, kind: input, shape index: {}]
  %s2 = inlined_call_operand.hbm [shape: f32[4,32,32], index: 2, kind: input, shape index: {}]
  %s3 = inlined_call_operand.vmem [shape: f32[2,32], index: 3, kind: input, shape index: {}]
  %s4 = inlined_call_operand.<no memory space> [shape: f32[1,1], index: 4, kind: input, shape index: {}]
  %s5 = inlined_call_operand.hbm [shape: f32[1,8], index: 5, kind: output, shape index: {}]
  %s6 = sld [smem:[#allocation0]]
  $region42: #{tpu_custom_call.1} parent=0
    _
  %s8 = ssub.s32 1, %s6
  %s9 = scalar_select 0, %s8, %s6
  %v10 = vstv %s4
  %11 = vst [vmem:[#allocation2] sm:$0x1] %v10
  $region1: #{tpu_custom_call.1} parent=0
    #allocation3 [shape = 'u8[4096]{0}', space=vmem, size = 0x1000, scoped, tag = 'input window, operand 0, single buffered']
    #allocation4 [shape = 's32[1]{0}', space=sflag, size = 0x4, scoped, tag = 'scoped memory for tpu_custom_call.1']
    #allocation5 [shape = 's32[1]{0}', space=sflag, size = 0x4, scoped, tag = 'scoped memory for tpu_custom_call.1']
    #allocation6 [shape = 'u8[4096]{0}', space=vmem, size = 0x1000, scoped, tag = 'input window, operand 1, single buffered']
    #allocation7 [shape = 's32[1]{0}', space=sflag, size = 0x4, scoped, tag = 'scoped memory for tpu_custom_call.1']
    #allocation8 [shape = 'u8[65536]{0}', space=vmem, size = 0x10000, scoped, tag = 'input window, operand 2, single buffered']
    #allocation9 [shape = 'u8[512]{0}', space=vmem, size = 0x400, scoped, tag = 'output window, operand 0, single buffered']
    %12 = vsyncpa [#allocation4], 0
    %13 = vsyncpa [#allocation7], 0
    %14 = vsyncpa [#allocation5], 0
    // Predicated region
    $region2: #{tpu_custom_call.1} parent=1 // pred_check
      _
    $region3: #{tpu_custom_call.1} parent=1 // pred_check_branch
      %16 = sbr.rel (0) target = $region5
    $region4: #{tpu_custom_call.1} parent=1 // pred_region
      %18 = vsyncadd [#allocation4], 0
      %s20 = sshll.u32 %s0, 4
      %s21 = int_to_ptr.hbm [resolvable:$true] %s20
      %s22 = sshll.u32 [#allocation3], 4
      %s23 = int_to_ptr.vmem [resolvable:$true] %s22
      %25 = dma.hbm_to_vmem [thread:$0]  %s21, 128, %s23, [#allocation4]
    $region5: #{tpu_custom_call.1} parent=1 // pred_fallthru
      _
    // Predicated region
    $region6: #{tpu_custom_call.1} parent=1 // pred_check
      _
    $region7: #{tpu_custom_call.1} parent=1 // pred_check_branch
      %27 = sbr.rel (0) target = $region9
    $region8: #{tpu_custom_call.1} parent=1 // pred_region
      %29 = vsyncadd [#allocation7], 0
      %s31 = sshll.u32 %s1, 4
      %s32 = int_to_ptr.hbm [resolvable:$true] %s31
      %s33 = sshll.u32 [#allocation6], 4
      %s34 = int_to_ptr.vmem [resolvable:$true] %s33
      %36 = dma.hbm_to_vmem [thread:$0]  %s32, 128, %s34, [#allocation7]
    $region9: #{tpu_custom_call.1} parent=1 // pred_fallthru
      _
    // Predicated region
    $region10: #{tpu_custom_call.1} parent=1 // pred_check
      _
    $region11: #{tpu_custom_call.1} parent=1 // pred_check_branch
      %38 = sbr.rel (0) target = $region13
    $region12: #{tpu_custom_call.1} parent=1 // pred_region
      %40 = vsyncadd [#allocation7], 0
      %s41 = sshll.u32 %s2, 4
      %s42 = int_to_ptr.hbm [resolvable:$true] %s41
      %s43 = sshll.u32 [#allocation8], 4
      %s44 = int_to_ptr.vmem [resolvable:$true] %s43
      %49 = dma.hbm_to_vmem [thread:$0]  %s42, 2048, %s44, [#allocation7], 128, 128, 8
    $region13: #{tpu_custom_call.1} parent=1 // pred_fallthru
      _
    // Predicated region
    $region14: #{tpu_custom_call.1} parent=1 // pred_check
      _
    $region15: #{tpu_custom_call.1} parent=1 // pred_check_branch
      %51 = sbr.rel (0) target = $region17
    $region16: #{tpu_custom_call.1} parent=1 // pred_region
      _
    $region17: #{tpu_custom_call.1} parent=1 // pred_fallthru
      _
    // Predicated region
    $region18: #{tpu_custom_call.1} parent=1 // pred_check
      _
    $region19: #{tpu_custom_call.1} parent=1 // pred_check_branch
      %53 = sbr.rel (0) target = $region21
    $region20: #{tpu_custom_call.1} parent=1 // pred_region
      _
    $region21: #{tpu_custom_call.1} parent=1 // pred_fallthru
      _
    // Predicated region
    $region22: #{tpu_custom_call.1} parent=1 // pred_check
      _
    $region23: #{tpu_custom_call.1} parent=1 // pred_check_branch
      %55 = sbr.rel (0) target = $region25
    $region24: #{tpu_custom_call.1} parent=1 // pred_region
      %57 = dma.done [#allocation4], 128
    $region25: #{tpu_custom_call.1} parent=1 // pred_fallthru
      _
    // Predicated region
    $region26: #{tpu_custom_call.1} parent=1 // pred_check
      _
    $region27: #{tpu_custom_call.1} parent=1 // pred_check_branch
      %59 = sbr.rel (0) target = $region29
    $region28: #{tpu_custom_call.1} parent=1 // pred_region
      %61 = dma.done [#allocation7], 128
    $region29: #{tpu_custom_call.1} parent=1 // pred_fallthru
      _
    // Predicated region
    $region30: #{tpu_custom_call.1} parent=1 // pred_check
      _
    $region31: #{tpu_custom_call.1} parent=1 // pred_check_branch
      %63 = sbr.rel (0) target = $region33
    $region32: #{tpu_custom_call.1} parent=1 // pred_region
      %65 = dma.done [#allocation7], 2048
    $region33: #{tpu_custom_call.1} parent=1 // pred_fallthru
      _
    %v66 = vld [vmem:[#allocation3] sm:$0xff]
    %v67 = vld [vmem:[#allocation6] sm:$0xff]
    %v68 = vmul.f32 %v66, %v67
    %v69 = vsub.f32 %v66, %v67
    %v70 = vand.u32 2147483647, %v69
    %v71 = vld [vmem:[#allocation8] sm:$0xff]
    %v72 = vld [vmem:[#allocation8 + $0x8] sm:$0xff]
    %v73 = vld [vmem:[#allocation8 + $0x10] sm:$0xff]
    %v74 = vld [vmem:[#allocation8 + $0x18] sm:$0xff]
    %s75 = scalar_lea.vmem [#allocation8], 32
    %v76 = vld [vmem:[%s75] sm:$0xff]
    %v77 = vld [vmem:[%s75 + $0x8] sm:$0xff]
    %v78 = vld [vmem:[%s75 + $0x10] sm:$0xff]
    %v79 = vld [vmem:[%s75 + $0x18] sm:$0xff]
    %vm80 = vcmask 261120
    %v82 = vsel %vm80, %v67, 0
    %84 = vmatpush.msra.mxu0 0.0
    %85 = vmatpush.msra.mxu0 0.0
    %86 = vmatpush.msra.mxu0 0.0
    %87 = vmatpush.msra.mxu0 0.0
    %88 = vmatpush.msra.mxu0 0.0
    %89 = vmatpush.msra.mxu0 0.0
    %90 = vmatpush.msra.mxu0 0.0
    %91 = vmatpush.msra.mxu0 0.0
    %92 = vmatpush.msra.mxu0 0.0
    %93 = vmatpush.msra.mxu0 0.0
    %94 = vmatpush.msra.mxu0 0.0
    %95 = vmatpush.msra.mxu0 0.0
    %96 = vmatpush.msra.mxu0 %v79
    %97 = vmatpush.msra.mxu0 %v78
    %98 = vmatpush.msra.mxu0 %v77
    %99 = vmatpush.msra.mxu0 %v76
    %100 = vmatmul.f32.gmra.mxu0 %v82
    %v101 = vpop.f32.mrf.mxu0
    %v102 = vadd.f32 0.0, %v101
    %103 = vdwg.mxu0
    %v105 = vsel %vm80, %v66, 0
    %107 = vmatpush.msra.mxu0 0.0
    %108 = vmatpush.msra.mxu0 0.0
    %109 = vmatpush.msra.mxu0 0.0
    %110 = vmatpush.msra.mxu0 0.0
    %111 = vmatpush.msra.mxu0 0.0
    %112 = vmatpush.msra.mxu0 0.0
    %113 = vmatpush.msra.mxu0 0.0
    %114 = vmatpush.msra.mxu0 0.0
    %115 = vmatpush.msra.mxu0 0.0
    %116 = vmatpush.msra.mxu0 0.0
    %117 = vmatpush.msra.mxu0 0.0
    %118 = vmatpush.msra.mxu0 0.0
    %119 = vmatpush.msra.mxu0 %v74
    %120 = vmatpush.msra.mxu0 %v73
    %121 = vmatpush.msra.mxu0 %v72
    %122 = vmatpush.msra.mxu0 %v71
    %123 = vmatmul.f32.gmra.mxu0 %v105
    %v124 = vpop.f32.mrf.mxu0
    %v125 = vadd.f32 %v102, %v124
    %126 = vdwg.mxu0
    %s127 = scalar_lea.vmem [#allocation8], 64
    %v128 = vld [vmem:[%s127] sm:$0xff]
    %v129 = vld [vmem:[%s127 + $0x8] sm:$0xff]
    %v130 = vld [vmem:[%s127 + $0x10] sm:$0xff]
    %v131 = vld [vmem:[%s127 + $0x18] sm:$0xff]
    %v133 = vsel %vm80, %v68, 0
    %135 = vmatpush.msra.mxu0 0.0
    %136 = vmatpush.msra.mxu0 0.0
    %137 = vmatpush.msra.mxu0 0.0
    %138 = vmatpush.msra.mxu0 0.0
    %139 = vmatpush.msra.mxu0 0.0
    %140 = vmatpush.msra.mxu0 0.0
    %141 = vmatpush.msra.mxu0 0.0
    %142 = vmatpush.msra.mxu0 0.0
    %143 = vmatpush.msra.mxu0 0.0
    %144 = vmatpush.msra.mxu0 0.0
    %145 = vmatpush.msra.mxu0 0.0
    %146 = vmatpush.msra.mxu0 0.0
    %147 = vmatpush.msra.mxu0 %v131
    %148 = vmatpush.msra.mxu0 %v130
    %149 = vmatpush.msra.mxu0 %v129
    %150 = vmatpush.msra.mxu0 %v128
    %151 = vmatmul.f32.gmra.mxu0 %v133
    %v152 = vpop.f32.mrf.mxu0
    %v153 = vadd.f32 0.0, %v152
    %154 = vdwg.mxu0
    %v155 = vadd.f32 %v125, %v153
    %s156 = scalar_lea.vmem [#allocation8], 96
    %v157 = vld [vmem:[%s156] sm:$0xff]
    %v158 = vld [vmem:[%s156 + $0x8] sm:$0xff]
    %v159 = vld [vmem:[%s156 + $0x10] sm:$0xff]
    %v160 = vld [vmem:[%s156 + $0x18] sm:$0xff]
    %v162 = vsel %vm80, %v70, 0
    %164 = vmatpush.msra.mxu0 0.0
    %165 = vmatpush.msra.mxu0 0.0
    %166 = vmatpush.msra.mxu0 0.0
    %167 = vmatpush.msra.mxu0 0.0
    %168 = vmatpush.msra.mxu0 0.0
    %169 = vmatpush.msra.mxu0 0.0
    %170 = vmatpush.msra.mxu0 0.0
    %171 = vmatpush.msra.mxu0 0.0
    %172 = vmatpush.msra.mxu0 0.0
    %173 = vmatpush.msra.mxu0 0.0
    %174 = vmatpush.msra.mxu0 0.0
    %175 = vmatpush.msra.mxu0 0.0
    %176 = vmatpush.msra.mxu0 %v160
    %177 = vmatpush.msra.mxu0 %v159
    %178 = vmatpush.msra.mxu0 %v158
    %179 = vmatpush.msra.mxu0 %v157
    %180 = vmatmul.f32.gmra.mxu0 %v162
    %v181 = vpop.f32.mrf.mxu0
    %v182 = vadd.f32 0.0, %v181
    %183 = vdwg.mxu0
    %v184 = vadd.f32 %v155, %v182
    %v185 = vld [vmem:[%s3] sm:$0x1]
    %v186 = vperm.slane %v185, 0
    %v187 = vadd.f32 %v184, %v186
    %v188 = vtanh.pop %v187
    %v189 = vld [vmem:[%s3 + $0x1] sm:$0x1]
    %v190 = vperm.slane %v189, 0
    %v191 = vmul.f32 %v188, %v190
    %v192 = vsel %vm80, %v191, 0.0
    %193 = vadd.xlane.f32.xlu0 %v192
    %v194 = vpop.xlane.xlu0 %193
    %v195 = vld [vmem:[#allocation2] sm:$0x1]
    %197 = vset.pattern.permute.xlu0 0
    %198 = vperm.xlu0 %197, %v195
    %v199 = vpop.permute.xlu0 %198
    %v201 = vperm.slane %v199, 0
    %v202 = vadd.f32 %v194, %v201
    %v203 = vxor.u32 %v202, 2147483648
    %v204 = vmul.f32 %v203, 1.442695
    %v205 = vpow.pop %v204
    %v206 = vadd.f32 %v205, 1.0
    %v207 = vrcp.pop %v206
    %v208 = vmul.f32 %v206, %v207
    %v209 = vsub.f32 1.0, %v208
    %v210 = vmul.f32 %v207, %v209
    %v211 = vadd.f32 %v207, %v210
    %vm212 = vweird.f32 %v206
    %vm213 = vweird.f32 %v207
    %vm214 = vmor %vm212, %vm213
    %v215 = vsel %vm214, %v207, %v211
    %v216 = vand.u32 2147483647, %v206
    %vm217 = vcmp.eq.f32.partialorder %v216, 8.507059e+37
    %v218 = vand.u32 %v206, 2147483648
    %v219 = vor.u32 1.1754944e-38, %v218
    %v220 = vsel %vm217, %v219, %v215
    %v221 = vmul.f32 1.0, %v220
    %v223 = vlaneseq
    %v224 = vand.u32 %v223, 127
    %v225 = vperm.slane %v221, %v224
    %vm227 = vcmask 57344
    %228 = vst.msk [vmem:[#allocation9] sm:$0x1] %vm227, %v225
    // Predicated region
    $region34: #{tpu_custom_call.1} parent=1 // pred_check
      _
    $region35: #{tpu_custom_call.1} parent=1 // pred_check_branch
      %230 = sbr.rel (0) target = $region37
    $region36: #{tpu_custom_call.1} parent=1 // pred_region
      %232 = vsyncadd [#allocation5], 0
      %s234 = sshll.u32 [#allocation9], 4
      %s235 = int_to_ptr.vmem [resolvable:$true] %s234
      %s236 = sshll.u32 %s5, 4
      %s237 = int_to_ptr.hbm [resolvable:$true] %s236
      %239 = dma.vmem_to_hbm [thread:$0]  %s235, 16, %s237, [#allocation5]
    $region37: #{tpu_custom_call.1} parent=1 // pred_fallthru
      _
    // Predicated region
    $region38: #{tpu_custom_call.1} parent=1 // pred_check
      _
    $region39: #{tpu_custom_call.1} parent=1 // pred_check_branch
      %241 = sbr.rel (0) target = $region41
    $region40: #{tpu_custom_call.1} parent=1 // pred_region
      %243 = dma.done [#allocation5], 16
    $region41: #{tpu_custom_call.1} parent=1 // pred_fallthru
      _
    %244 = vsyncpa [#allocation4], 1
    %245 = vsyncpa [#allocation7], 1
    %246 = vsyncpa [#allocation5], 1

</llo_original>
